<compile_context>
chip_gen: v7x
topology: tpu7x:2x2x1
jax: 0.10.0
libtpu: 0.0.40
codegen_flags: <defaults>
</compile_context>

<pallas_src>
import jax
import jax.numpy as jnp
from jax.experimental import pallas as pl
from jax.experimental.pallas import tpu as pltpu


def _cdiv(a, b):
    return -(-a // b)


def _round_up(a, b):
    return _cdiv(a, b) * b


def _num_tensorcores():
    # Only v7x has 2 TensorCores per chip; v5e/v6e have 1.
    try:
        kind = jax.devices()[0].device_kind.lower()
        if "v7" in kind:
            return 2
    except Exception:
        pass
    return 1


def _vmem_limit_bytes(want_bytes):
    # Cap the scoped-VMEM request at 75% of physical VMEM (leaves headroom for
    # compiler-internal scratch + double-buffer slack on v7x's 64 MiB).
    try:
        phys = int(pltpu.get_tpu_info().vmem_capacity_bytes)
        cap = (phys * 3) // 4
    except Exception:
        cap = 48 * 1024 * 1024  # safe on every generation
    return int(min(cap, max(16 * 1024 * 1024, want_bytes)))


def _mish_from_f32(x, *, newton_steps):
    """Mish on an f32 tile, for use *inside* a Pallas kernel.

    Stable single-exp rewrite of tanh(softplus(x)):
        tanh(log(1 + u)) = (u^2 + 2u) / (u^2 + 2u + 2),  u = exp(x)
    evaluated with e = exp(-|x|) in (0, 1] so nothing overflows:
        x >= 0 :  (1 + 2e)   / (1 + 2e + 2e^2)
        x <  0 :  (e^2 + 2e) / (e^2 + 2e + 2)
    numer/denom share terms to trim the VALU chain; the approximate EUP
    reciprocal (rel. err ~2^-12) needs one Newton step for f32 and none for
    bf16/f16.
    """
    e = jnp.exp(-jnp.abs(x))
    e2 = e * e
    pos = x >= 0.0
    t = 2.0 * e
    numer = t + jnp.where(pos, 1.0, e2)
    denom = numer + jnp.where(pos, 2.0 * e2, 2.0)
    r = pl.reciprocal(denom, approx=True)
    for _ in range(newton_steps):
        r = r * (2.0 - denom * r)
    return x * numer * r


def _mish_kernel(x_ref, o_ref):
    x = x_ref[...].astype(jnp.float32)
    newton = 1 if jnp.dtype(o_ref.dtype).itemsize >= 4 else 0
    o_ref[...] = _mish_from_f32(x, newton_steps=newton).astype(o_ref.dtype)


def _mish_rows(x2d, tile_rows):
    """Run the Mish kernel over a lane-dense (rows, 128) slab."""
    rows, lane = x2d.shape
    dtype = x2d.dtype
    itemsize = jnp.dtype(dtype).itemsize
    # Minimum sublane tile per dtype: (8,128) f32, (16,128) bf16, (32,128) i8.
    min_rows = max(8, 32 // itemsize)

    # Generation-aware grid-step target: the >= 8-step floor only buys
    # megacore sharding on v7x (2 TCs); on 1-TC chips target ~4 steps so
    # medium tensors keep big blocks.
    target_steps = 4 * _num_tensorcores()

    tr_cap = max(min_rows, (tile_rows // min_rows) * min_rows)
    tr_target = _round_up(_cdiv(rows, target_steps), min_rows)
    tr = max(min_rows, min(tr_cap, tr_target))
    if tr >= rows:
        tr = rows  # single full-extent block — always layout-legal

    grid = (_cdiv(rows, tr),)  # ragged last block is masked by Pallas

    block_bytes = tr * lane * itemsize
    vmem_limit = _vmem_limit_bytes(6 * block_bytes)  # in+out double-buffered

    return pl.pallas_call(
        _mish_kernel,
        out_shape=jax.ShapeDtypeStruct((rows, lane), dtype),
        grid_spec=pltpu.PrefetchScalarGridSpec(
            num_scalar_prefetch=0,
            grid=grid,
            in_specs=[pl.BlockSpec((tr, lane), lambda i: (i, 0))],
            out_specs=pl.BlockSpec((tr, lane), lambda i: (i, 0)),
        ),
        compiler_params=pltpu.CompilerParams(
            dimension_semantics=("parallel",),
            vmem_limit_bytes=vmem_limit,
        ),
    )(x2d)


def _mish_ref(x):
    """Pure-XLA reference / tiny-tail fallback."""
    xf = x.astype(jnp.float32)
    return (xf * jnp.tanh(jax.nn.softplus(xf))).astype(x.dtype)


def mish(x, *, tile_rows=None, lane=128):
    """Mish(x) = x * tanh(softplus(x)) elementwise via a Pallas TPU kernel."""
    orig_shape = x.shape
    dtype = x.dtype
    assert jnp.issubdtype(dtype, jnp.floating), "mish expects a floating dtype"
    n = x.size
    itemsize = jnp.dtype(dtype).itemsize
    if tile_rows is None or tile_rows <= 0:
        # ~4 MiB blocks regardless of dtype (8192 rows f32, 16384 bf16, ...).
        tile_rows = max(8, (8192 * 4) // itemsize)

    x_flat = x.reshape(-1)
    if n % lane == 0:
        # Zero-copy fast path: a pure reshape; any ragged last *row-block* is
        # handled by the cdiv grid. Garbage in the padded region of that block
        # flows through exp/where but is never stored -> harmless.
        out = _mish_rows(x_flat.reshape(n // lane, lane), tile_rows).reshape(-1)
    else:
        n_main = (n // lane) * lane
        if n_main == 0:
            out = _mish_ref(x_flat)  # tiny tensor: plain XLA
        else:
            # Kernel runs zero-copy on the aligned prefix; the <128-element
            # tail is finished in plain XLA — avoids whole-tensor pad + slice.
            main = _mish_rows(
                x_flat[:n_main].reshape(n_main // lane, lane), tile_rows
            ).reshape(-1)
            tail = _mish_ref(x_flat[n_main:])
            out = jnp.concatenate([main, tail])
    return out.reshape(orig_shape)


# ---------------------------------------------------------------------------
# Fused producer: GEMM (1x1 Conv1d / Linear) with the activation applied to
# the f32 accumulator tile before the output store (no separate HBM pass).
# ---------------------------------------------------------------------------


def _make_matmul_act_kernel(act, newton_steps):
    def kernel(a_ref, b_ref, o_ref, acc_ref):
        @pl.when(pl.program_id(2) == 0)
        def _init():
            acc_ref[...] = jnp.zeros_like(acc_ref)

        acc_ref[...] += jnp.dot(a_ref[...], b_ref[...],
                                preferred_element_type=jnp.float32)

        @pl.when(pl.program_id(2) == pl.num_programs(2) - 1)
        def _store():
            acc = acc_ref[...]
            if act == "mish":
                acc = _mish_from_f32(acc, newton_steps=newton_steps)
            elif act == "relu":
                acc = jnp.maximum(acc, 0.0)
            o_ref[...] = acc.astype(o_ref.dtype)

    return kernel


def matmul_act(a, b, *, act="mish", out_dtype=None, tm=128, tn=128, tk=128):
    """out = act(a @ b) with the activation fused into the matmul epilogue."""
    M, K = a.shape
    K2, N = b.shape
    assert K == K2, "inner dimensions must match"
    out_dtype = out_dtype or a.dtype

    tm = min(tm, _round_up(M, 8))
    tn = min(tn, _round_up(N, 128))
    tk = min(tk, _round_up(K, 128))
    Mp, Kp, Np = _round_up(M, tm), _round_up(K, tk), _round_up(N, tn)

    a_p = a if (Mp == M and Kp == K) else jnp.pad(a, ((0, Mp - M), (0, Kp - K)))
    b_p = b if (Kp == K and Np == N) else jnp.pad(b, ((0, Kp - K), (0, Np - N)))

    newton = 1 if jnp.dtype(out_dtype).itemsize >= 4 else 0
    kernel = _make_matmul_act_kernel(act, newton)

    out = pl.pallas_call(
        kernel,
        out_shape=jax.ShapeDtypeStruct((Mp, Np), out_dtype),
        grid_spec=pltpu.PrefetchScalarGridSpec(
            num_scalar_prefetch=0,
            grid=(Mp // tm, Np // tn, Kp // tk),
            in_specs=[pl.BlockSpec((tm, tk), lambda i, j, k: (i, k)),
                      pl.BlockSpec((tk, tn), lambda i, j, k: (k, j))],
            out_specs=pl.BlockSpec((tm, tn), lambda i, j, k: (i, j)),
            scratch_shapes=[pltpu.VMEM((tm, tn), jnp.float32)],
        ),
        compiler_params=pltpu.CompilerParams(
            dimension_semantics=("parallel", "parallel", "arbitrary"),
        ),
    )(a_p, b_p)

    if Mp != M or Np != N:
        out = out[:M, :N]
    return out


if __name__ == "__main__":
    key = jax.random.PRNGKey(0)
    k1, k2, k3, k4 = jax.random.split(key, 4)

    # 1) Standalone elementwise activation on an NCHW-style activation map.
    x = jax.random.normal(k1, (2, 4, 16, 16), dtype=jnp.float32)
    out = mish(x)
    jax.block_until_ready(out)
    ref = _mish_ref(x)
    assert out.shape == x.shape and out.dtype == x.dtype
    assert jnp.allclose(out, ref, atol=1e-5, rtol=1e-5), "mish mismatch"

    # 2) Misaligned size: kernel on the aligned prefix + tiny XLA tail.
    x_odd = jax.random.normal(k2, (2, 3, 45), dtype=jnp.float32)
    out_odd = mish(x_odd)
    jax.block_until_ready(out_odd)
    assert jnp.allclose(out_odd, _mish_ref(x_odd), atol=1e-5, rtol=1e-5), \
        "mish (misaligned) mismatch"

    # 3) Fused producer: BLTnet-style 1x1 Conv1d (batch=2, length=28, 16->32
    #    channels) expressed as a GEMM with the activation applied to the f32
    #    accumulator before the store (resolves the fusion TODO).
    B, L, Cin, Cout = 2, 28, 16, 32
    w = jax.random.normal(k3, (Cout, Cin), dtype=jnp.float32) * 0.1
    h = jax.random.normal(k4, (B, Cin, L), dtype=jnp.float32)
    hx = jnp.transpose(h, (1, 0, 2)).reshape(Cin, B * L)  # (Cin, B*L)
    fused = matmul_act(w, hx, act="mish")
    jax.block_until_ready(fused)
    ref_fused = _mish_ref(jnp.dot(w, hx, precision=jax.lax.Precision.HIGHEST))
    assert fused.shape == (Cout, B * L)
    assert jnp.allclose(fused, ref_fused, atol=1e-3, rtol=1e-3), \
        "fused matmul+mish mismatch"

    print("KERNEL_OK")
</pallas_src>

<mosaic_0001>
module attributes {stable_mosaic.version = 11 : i64} {
  func.func @_mish_kernel(%arg0: i32, %arg1: memref<8x128xf32, #tpu.memory_space<vmem>>, %arg2: memref<8x128xf32, #tpu.memory_space<vmem>>) attributes {dimension_semantics = [#tpu.dimension_semantics<parallel>], iteration_bounds = array<i64: 2>, scalar_prefetch = 0 : i64, scratch_operands = 0 : i64, tpu.core_type = #tpu.core_type<tc>, window_params = [{transform_indices = @transform_0, window_bounds = array<i64: 8, 128>}, {transform_indices = @transform_1, window_bounds = array<i64: 8, 128>}]} {
    %c0 = arith.constant 0 : index
    %c0_0 = arith.constant 0 : index
    %0 = vector.load %arg1[%c0, %c0_0] : memref<8x128xf32, #tpu.memory_space<vmem>>, vector<8x128xf32>
    %1 = math.absf %0 : vector<8x128xf32>
    %cst = arith.constant 0.000000e+00 : f32
    %2 = vector.broadcast %cst : f32 to vector<8x128xf32>
    %3 = arith.subf %2, %1 : vector<8x128xf32>
    %4 = math.exp %3 : vector<8x128xf32>
    %5 = arith.mulf %4, %4 : vector<8x128xf32>
    %cst_1 = arith.constant 0.000000e+00 : f32
    %6 = vector.broadcast %cst_1 : f32 to vector<8x128xf32>
    %7 = arith.cmpf oge, %0, %6 : vector<8x128xf32>
    %cst_2 = arith.constant 2.000000e+00 : f32
    %8 = vector.broadcast %cst_2 : f32 to vector<8x128xf32>
    %9 = arith.mulf %8, %4 : vector<8x128xf32>
    %cst_3 = arith.constant 1.000000e+00 : f32
    %10 = vector.broadcast %cst_3 : f32 to vector<8x128xf32>
    %11 = arith.select %7, %10, %5 : vector<8x128xi1>, vector<8x128xf32>
    %12 = arith.addf %9, %11 : vector<8x128xf32>
    %cst_4 = arith.constant 2.000000e+00 : f32
    %13 = vector.broadcast %cst_4 : f32 to vector<8x128xf32>
    %14 = arith.mulf %13, %5 : vector<8x128xf32>
    %cst_5 = arith.constant 2.000000e+00 : f32
    %15 = vector.broadcast %cst_5 : f32 to vector<8x128xf32>
    %16 = arith.select %7, %14, %15 : vector<8x128xi1>, vector<8x128xf32>
    %17 = arith.addf %12, %16 : vector<8x128xf32>
    %18 = tpu.reciprocal %17 {approx = true} : vector<8x128xf32> -> vector<8x128xf32>
    %19 = arith.mulf %17, %18 : vector<8x128xf32>
    %cst_6 = arith.constant 2.000000e+00 : f32
    %20 = vector.broadcast %cst_6 : f32 to vector<8x128xf32>
    %21 = arith.subf %20, %19 : vector<8x128xf32>
    %22 = arith.mulf %18, %21 : vector<8x128xf32>
    %23 = arith.mulf %0, %12 : vector<8x128xf32>
    %24 = arith.mulf %23, %22 : vector<8x128xf32>
    %c0_7 = arith.constant 0 : index
    %c0_8 = arith.constant 0 : index
    %25 = vector.load %arg2[%c0_7, %c0_8] : memref<8x128xf32, #tpu.memory_space<vmem>>, vector<8x128xf32>
    tpu.vector_store %arg2[%c0_7, %c0_8], %24 {strides = array<i32>} : memref<8x128xf32, #tpu.memory_space<vmem>>, vector<8x128xf32>,
    return
  }
  func.func @transform_0(%arg0: i32) -> (i32, i32) {
    %c0_i32 = arith.constant 0 : i32
    %c0_i32_0 = arith.constant 0 : i32
    return %arg0, %c0_i32 : i32, i32
  }
  func.func @transform_1(%arg0: i32) -> (i32, i32) {
    %c0_i32 = arith.constant 0 : i32
    %c0_i32_0 = arith.constant 0 : i32
    return %arg0, %c0_i32 : i32, i32
  }
}

</mosaic_0001>

<llo_original>
// kernel: tpu_custom_call.1
$region0: #{tpu_custom_call.1}
  #allocation0 [shape = 'u32[]', space=smem, size = 0x4, offset = 0x4, fixed_abs, tag = 'smem constant byte address 0x4 - core index']
  #allocation1 [shape = 'u32[144,128]{1,0:T(1,128)}', space=vmem, size = 0x12000, scoped, tag = 'internal scratch']
  %s0 = inlined_call_operand.hbm [shape: f32[16,128], index: 0, kind: input, shape index: {}]
  %s1 = inlined_call_operand.hbm [shape: f32[16,128], index: 1, kind: output, shape index: {}]
  %s2 = sld [smem:[#allocation0]]
  $region41: #{tpu_custom_call.1} parent=0
    _
  %s4 = ssub.s32 1, %s2
  %s5 = scalar_select 0, %s4, %s2
  $region1: #{tpu_custom_call.1} parent=0
    #allocation2 [shape = 'u8[8192]{0}', space=vmem, size = 0x2000, scoped, tag = 'input window, operand 0']
    #allocation3 [shape = 's32[2]{0}', space=sflag, size = 0x8, scoped, tag = 'scoped memory for tpu_custom_call.1']
    #allocation4 [shape = 's32[2]{0}', space=sflag, size = 0x8, scoped, tag = 'scoped memory for tpu_custom_call.1']
    #allocation5 [shape = 'u8[8192]{0}', space=vmem, size = 0x2000, scoped, tag = 'output window, operand 0']
    %6 = vsyncpa [#allocation3], 0
    %s7 = scalar_lea.sflag [#allocation3], 1
    %8 = vsyncpa %s7, 0
    %9 = vsyncpa [#allocation4], 0
    %s10 = scalar_lea.sflag [#allocation4], 1
    %11 = vsyncpa %s10, 0
    loop: start=0, step=1, limit=4
    $region2: #{tpu_custom_call.1} parent=1 // loop_pre_header
      _
    $region3: #{tpu_custom_call.1} parent=1 // loop_header
      %s13 = sphi 0, %s17
      %p14 = scmp.ge.s32.totalorder %s13, 4
      %s23 = sphi 0, %s25
      %s26 = sphi 0, %s23
      %s27 = sphi 0, %s26
      %s43 = sphi 0, %s27
      %s49 = sphi 0, %s51
      %s52 = sphi 0, %s49
      %s53 = sphi 0, %s52
      %s69 = sphi 0, %s53
    $region4: #{tpu_custom_call.1} parent=1 // loop_header_branch
      %16 = sbr.rel (%p14) target = $region8
    $region5: #{tpu_custom_call.1} parent=1 // loop_body
      %s18 = ssub.s32 %s13, 1
      %s19 = ssub.s32 %s13, 2
      %s20 = sadd.s32 %s13, 1
      %s21 = ssub.s32 %s13, %s20
      %p22 = scmp.eq.s32.totalorder %s21, 0
      %s24 = sadd.s32 %s23, 1
      %s25 = scalar_select %p22, %s23, %s24
      %p28 = pneg %p22
      %p29 = scmp.eq.s32.totalorder %s13, 1
      %p30 = por %p28, %p29
      %p31 = scmp.ne.s32.totalorder %s23, %s26
      %p32 = scmp.eq.s32.totalorder %s13, 0
      %p33 = por %p31, %p32
      %p34 = scmp.ne.s32.totalorder %s23, %s26
      %p35 = scmp.eq.s32.totalorder %s18, 1
      %p36 = por %p34, %p35
      %p37 = scmp.ne.s32.totalorder %s26, %s27
      %p38 = scmp.eq.s32.totalorder %s18, 0
      %p39 = por %p37, %p38
      %p40 = scmp.ne.s32.totalorder %s26, %s27
      %p41 = scmp.eq.s32.totalorder %s19, 1
      %p42 = por %p40, %p41
      %p44 = scmp.ne.s32.totalorder %s27, %s43
      %p45 = scmp.eq.s32.totalorder %s19, 0
      %p46 = por %p44, %p45
      %s47 = ssub.s32 %s13, %s20
      %p48 = scmp.eq.s32.totalorder %s47, 0
      %s50 = sadd.s32 %s49, 1
      %s51 = scalar_select %p48, %s49, %s50
      %p54 = pneg %p48
      %p55 = scmp.eq.s32.totalorder %s13, 1
      %p56 = por %p54, %p55
      %p57 = scmp.ne.s32.totalorder %s49, %s52
      %p58 = scmp.eq.s32.totalorder %s13, 0
      %p59 = por %p57, %p58
      %p60 = scmp.ne.s32.totalorder %s49, %s52
      %p61 = scmp.eq.s32.totalorder %s18, 1
      %p62 = por %p60, %p61
      %p63 = scmp.ne.s32.totalorder %s52, %s53
      %p64 = scmp.eq.s32.totalorder %s18, 0
      %p65 = por %p63, %p64
      %p66 = scmp.ne.s32.totalorder %s52, %s53
      %p67 = scmp.eq.s32.totalorder %s19, 1
      %p68 = por %p66, %p67
      %p70 = scmp.ne.s32.totalorder %s53, %s69
      %p71 = scmp.eq.s32.totalorder %s19, 0
      %p72 = por %p70, %p71
      %p73 = scmp.le.s32.totalorder 1, %s13
      %p74 = scmp.lt.s32.totalorder %s13, 3
      %p75 = pnand %p73, %p74
      %p76 = pneg %p75
      // Predicated region
      $region9: #{tpu_custom_call.1} parent=5 // pred_check
        _
      $region10: #{tpu_custom_call.1} parent=5 // pred_check_branch
        %78 = sbr.rel (%p75) target = $region12
      $region11: #{tpu_custom_call.1} parent=5 // pred_region
        %s79 = ssub.s32 %s13, 1
      $region12: #{tpu_custom_call.1} parent=5 // pred_fallthru
        _
      %p80 = scmp.lt.s32.totalorder %s13, 2
      // Predicated region
      $region13: #{tpu_custom_call.1} parent=5 // pred_check
        %p81 = pneg %p80
      $region14: #{tpu_custom_call.1} parent=5 // pred_check_branch
        %83 = sbr.rel (%p81) target = $region16
      $region15: #{tpu_custom_call.1} parent=5 // pred_region
        // Predicated region
        $region17: #{tpu_custom_call.1} parent=15 // pred_check
          %p84 = pneg %p33
        $region18: #{tpu_custom_call.1} parent=15 // pred_check_branch
          %86 = sbr.rel (%p84) target = $region20
        $region19: #{tpu_custom_call.1} parent=15 // pred_region
          %s87 = sand.u32 %s23, 1
          %s88 = scalar_lea.sflag [#allocation3], %s87
          %s89 = sand.u32 %s23, 1
          %s90 = smul.addr %s89, 8
          %s91 = scalar_lea.vmem [#allocation2], %s90
          %s93 = ssub.s32 128, 128
          %94 = vsyncadd %s88, %s93
          %s95 = smul.addr %s13, 128
          %s96 = scalar_lea.hbm %s0, %s95
          %s98 = sshll.u32 %s91, 4
          %s99 = int_to_ptr.vmem [resolvable:$true] %s98
          %101 = dma.hbm_to_vmem [thread:$0]  %s96, 128, %s99, %s88
        $region20: #{tpu_custom_call.1} parent=15 // pred_fallthru
          _
      $region16: #{tpu_custom_call.1} parent=5 // pred_fallthru
        _
      %p102 = scmp.le.s32.totalorder 1, %s13
      %p103 = scmp.lt.s32.totalorder %s13, 3
      %p104 = pnand %p102, %p103
      %p105 = pneg %p104
      // Predicated region
      $region21: #{tpu_custom_call.1} parent=5 // pred_check
        _
      $region22: #{tpu_custom_call.1} parent=5 // pred_check_branch
        %107 = sbr.rel (%p104) target = $region24
      $region23: #{tpu_custom_call.1} parent=5 // pred_region
        %s108 = ssub.s32 %s13, 1
        %s109 = sand.u32 %s26, 1
        %s110 = scalar_lea.sflag [#allocation3], %s109
        %s111 = sand.u32 %s26, 1
        %s112 = smul.addr %s111, 8
        %s113 = scalar_lea.vmem [#allocation2], %s112
        // Predicated region
        $region25: #{tpu_custom_call.1} parent=23 // pred_check
          %p114 = pneg %p39
        $region26: #{tpu_custom_call.1} parent=23 // pred_check_branch
          %116 = sbr.rel (%p114) target = $region28
        $region27: #{tpu_custom_call.1} parent=23 // pred_region
          %117 = dma.done %s110, 128
        $region28: #{tpu_custom_call.1} parent=23 // pred_fallthru
          _
        %s118 = sand.u32 %s26, 1
        %s119 = scalar_lea.sflag [#allocation3], %s118
        %s120 = sand.u32 %s26, 1
        %s121 = smul.addr %s120, 8
        %s122 = scalar_lea.vmem [#allocation2], %s121
        %p123 = pneg %p39
        %p124 = pneg %p36
        %p125 = pneg %p65
        %p126 = pneg %p62
        %s127 = sand.u32 %s52, 1
        %s128 = scalar_lea.sflag [#allocation4], %s127
        %s129 = sand.u32 %s52, 1
        %s130 = smul.addr %s129, 8
        %s131 = scalar_lea.vmem [#allocation5], %s130
        %v132 = vld [vmem:[%s113] sm:$0xff]
        %v133 = vand.u32 2147483647, %v132
        %v134 = vsub.f32 0.0, %v133
        %v135 = vmul.f32 %v134, 1.442695
        %v136 = vpow.pop %v135
        %v137 = vmul.f32 %v136, %v136
        %vm138 = vcmp.ge.f32.partialorder %v132, 0.0
        %v139 = vmul.f32 %v136, 2.0
        %v140 = vsel %vm138, 1.0, %v137
        %v141 = vadd.f32 %v139, %v140
        %v142 = vmul.f32 %v137, 2.0
        %v143 = vsel %vm138, %v142, 2.0
        %v144 = vadd.f32 %v141, %v143
        %v145 = vrcp.pop %v144
        %v146 = vmul.f32 %v144, %v145
        %v147 = vsub.f32 2.0, %v146
        %v148 = vmul.f32 %v145, %v147
        %v149 = vmul.f32 %v132, %v141
        %v150 = vmul.f32 %v149, %v148
        %151 = vst [vmem:[%s131] sm:$0xff] %v150
        %s152 = sand.u32 %s52, 1
        %s153 = scalar_lea.sflag [#allocation4], %s152
        %s154 = sand.u32 %s52, 1
        %s155 = smul.addr %s154, 8
        %s156 = scalar_lea.vmem [#allocation5], %s155
        // Predicated region
        $region29: #{tpu_custom_call.1} parent=23 // pred_check
          %p157 = pneg %p62
        $region30: #{tpu_custom_call.1} parent=23 // pred_check_branch
          %159 = sbr.rel (%p157) target = $region32
        $region31: #{tpu_custom_call.1} parent=23 // pred_region
          %s161 = ssub.s32 128, 128
          %162 = vsyncadd %s153, %s161
          %s163 = smul.addr %s18, 128
          %s164 = scalar_lea.hbm %s1, %s163
          %s166 = sshll.u32 %s156, 4
          %s167 = int_to_ptr.vmem [resolvable:$true] %s166
          %169 = dma.vmem_to_hbm [thread:$0]  %s167, 128, %s164, %s153
        $region32: #{tpu_custom_call.1} parent=23 // pred_fallthru
          _
      $region24: #{tpu_custom_call.1} parent=5 // pred_fallthru
        _
      %p170 = scmp.le.s32.totalorder 2, %s13
      // Predicated region
      $region33: #{tpu_custom_call.1} parent=5 // pred_check
        %p171 = pneg %p170
      $region34: #{tpu_custom_call.1} parent=5 // pred_check_branch
        %173 = sbr.rel (%p171) target = $region36
      $region35: #{tpu_custom_call.1} parent=5 // pred_region
        %s174 = ssub.s32 %s13, 2
        // Predicated region
        $region37: #{tpu_custom_call.1} parent=35 // pred_check
          %p175 = pneg %p68
        $region38: #{tpu_custom_call.1} parent=35 // pred_check_branch
          %177 = sbr.rel (%p175) target = $region40
        $region39: #{tpu_custom_call.1} parent=35 // pred_region
          %s178 = sand.u32 %s53, 1
          %s179 = scalar_lea.sflag [#allocation4], %s178
          %s180 = sand.u32 %s53, 1
          %s181 = smul.addr %s180, 8
          %s182 = scalar_lea.vmem [#allocation5], %s181
          %183 = dma.done %s179, 128
        $region40: #{tpu_custom_call.1} parent=35 // pred_fallthru
          _
      $region36: #{tpu_custom_call.1} parent=5 // pred_fallthru
        _
    $region6: #{tpu_custom_call.1} parent=1 // loop_footer
      %s17 = sadd.s32 1, %s13
    $region7: #{tpu_custom_call.1} parent=1 // loop_footer_branch
      %12 = sbr.rel target = $region3
    $region8: #{tpu_custom_call.1} parent=1 // loop_exit
      _
    %184 = vsyncpa [#allocation3], 1
    %s185 = scalar_lea.sflag [#allocation3], 1
    %186 = vsyncpa %s185, 1
    %187 = vsyncpa [#allocation4], 1
    %s188 = scalar_lea.sflag [#allocation4], 1
    %189 = vsyncpa %s188, 1

</llo_original>
